<compile_context>
chip_gen: v7x
topology: tpu7x:2x2x1
jax: 0.10.0
libtpu: 0.0.40
codegen_flags: <defaults>
</compile_context>

<pallas_src>
import jax
import jax.numpy as jnp
from jax import lax
from jax.experimental import pallas as pl
from jax.experimental.pallas import tpu as pltpu


def _round_up(a, m):
    return (a + m - 1) // m * m


def _device_kind():
    try:
        return str(getattr(jax.devices()[0], "device_kind", "")).lower()
    except Exception:
        return ""


def _vmem_capacity_bytes(kind):
    try:
        cap = int(pltpu.get_tpu_info().vmem_capacity_bytes)
        if cap > 0:
            return cap
    except Exception:
        pass
    if "v7" in kind:
        return 64 * 1024 * 1024
    return 128 * 1024 * 1024


def pam_forward(x_nchw, gamma, *, tn=None, mxu_bf16=True, return_attention=True,
                att_dtype=None, exp_bf16=None, n_split=None):
    """Pallas-TPU forward of the DANet PAM module.

    x_nchw: (B, C, H, W) float32.  gamma: (1,) float32 (nn.Parameter).
    Returns (out (B, C, H, W), attention (B, H*W, H*W) or None).

    Note: on the fast path (mxu_bf16=True) the attention map is returned in
    bf16 and softmax denominators use the approximate EUP reciprocal, so rows
    sum to 1 only to ~1e-3 relative accuracy.
    """
    B, C, H, W = x_nchw.shape
    N = H * W
    Np = max(_round_up(N, 128), 128)

    x = x_nchw.reshape(B, C, N)
    if Np != N:
        x = jnp.pad(x, ((0, 0), (0, 0), (0, Np - N)))

    kind = _device_kind()
    is_v5e = any(s in kind for s in ("v5e", "v5 lite", "v5lite"))

    if att_dtype is None:
        att_dtype = jnp.bfloat16 if mxu_bf16 else jnp.float32
    att_dtype = jnp.dtype(att_dtype)
    if exp_bf16 is None:
        exp_bf16 = bool(mxu_bf16) and C < 128 and not is_v5e
    exp_bf16 = bool(exp_bf16) and bool(mxu_bf16)       # never on the exact path

    approx = bool(mxu_bf16)          # approx EUP reciprocal only on fast path
    xm_dtype = jnp.bfloat16 if mxu_bf16 else jnp.float32
    x_itm = jnp.dtype(x.dtype).itemsize
    xm_itm = jnp.dtype(xm_dtype).itemsize

    # x's block index is constant across the tile axes -> one VMEM buffer is
    # enough (saves a full C*Np slab vs default double-buffering).
    x_index = lambda b, h, t, g: (b, 0, 0)
    try:
        x_spec = pl.BlockSpec((1, C, Np), x_index, pipeline_mode=pl.Buffered(1))
        n_xbuf = 1
    except (TypeError, AttributeError):                # older jax fallback
        x_spec = pl.BlockSpec((1, C, Np), x_index)
        n_xbuf = 2

    # ---- generation-aware VMEM budget & tile size ---------------------------
    vmem_cap = _vmem_capacity_bytes(kind)
    vmem_budget = int(vmem_cap * 0.85)

    def resident_bytes(t):
        b = n_xbuf * C * Np * x_itm                    # x input block(s)
        b += C * Np * xm_itm                           # cached channel softmax
        b += 2 * C * t * x_itm                         # out tile, double-buffered
        if return_attention:
            b += 2 * t * Np * att_dtype.itemsize       # att tile, double-buffered
        b += t * Np * (4 + (2 if exp_bf16 else 4) + 4)  # energy / p / cast temps
        b += 2 << 20                                   # misc headroom
        return b

    if tn is not None and (Np % tn != 0 or tn % 128 != 0):
        tn = None                                      # fall back to auto
    if tn is None:
        cands = [c for c in ((256, 128) if is_v5e else (512, 256, 128))
                 if Np % c == 0]
        if not cands:
            cands = [128]
        tn = cands[-1]
        for c in cands:
            if resident_bytes(c) <= vmem_budget:
                tn = c
                break
    n_tiles = Np // tn

    # B == 1: split the tile range over a second parallel axis so both v7x
    # TensorCores stay busy (duplicated channel softmax is O(C*N) << N^2).
    if n_split is None:
        n_split = 2 if (B == 1 and n_tiles % 2 == 0) else 1
    if n_split < 1 or n_tiles % n_split != 0:
        n_split = 1
    tiles_per_split = n_tiles // n_split

    est = resident_bytes(tn)
    vmem_limit = int(min(max(2 * est, 32 * 1024 * 1024), vmem_budget))
    if est > vmem_limit:
        vmem_limit = int(min(est + (8 << 20), vmem_cap))

    need_mask = Np != N

    def _channel_softmax(xf):            # softmax over channels (axis 0), f32
        m = jnp.max(xf, axis=0, keepdims=True)
        e = jnp.exp(xf - m)
        return e * pl.reciprocal(jnp.sum(e, axis=0, keepdims=True), approx=approx)

    def _body(gamma_ref, x_ref, out_ref, att_ref, xm_ref):
        h = pl.program_id(1)
        t = pl.program_id(2)

        # Channel softmax cached once per (batch, split) element in VMEM.
        # Only valid because the tile axis is the innermost, sequential,
        # "arbitrary" grid axis -- do not reorder / parallelize it.
        @pl.when(t == 0)
        def _():
            xm_ref[...] = _channel_softmax(
                x_ref[0].astype(jnp.float32)).astype(xm_ref.dtype)

        tile = h * tiles_per_split + t
        start = pl.multiple_of(tile * tn, tn)
        x_all = xm_ref[...]                             # (C, Np)
        x_q = xm_ref[:, pl.ds(start, tn)]               # (C, tn)

        # energy (tn, Np) = x_q^T @ x_all; contraction over C = sublane dim of
        # both operands (MXU T-N orientation, no materialized XLU transpose).
        energy = lax.dot_general(
            x_q, x_all, (((0,), (0,)), ((), ())),
            preferred_element_type=jnp.float32)
        if need_mask:
            col = lax.broadcasted_iota(jnp.int32, (tn, Np), 1)
            energy = jnp.where(col < N, energy, -1e30)  # mask padded key columns

        # attention = softmax(energy, dim=-1)
        em = jnp.max(energy, axis=-1, keepdims=True)
        if exp_bf16:
            # EUP-bound regime (small C): bf16 exp roughly doubles EUP
            # throughput; row sum must be accumulated in f32.
            p = jnp.exp((energy - em).astype(jnp.bfloat16))
            denom = jnp.sum(p, axis=-1, keepdims=True, dtype=jnp.float32)
            p = p * pl.reciprocal(denom, approx=approx).astype(p.dtype)
        else:
            p = jnp.exp(energy - em)
            p = p * pl.reciprocal(jnp.sum(p, axis=-1, keepdims=True),
                                  approx=approx)

        if att_ref is not None:
            att_ref[0] = p.astype(att_ref.dtype)        # lane-dense (tn, Np)

        # out (C, tn) = x_sm @ att_tile^T; contraction over Np = lane dim of
        # both operands (MXU N-T orientation, standard attention p@v form).
        out = lax.dot_general(
            x_all, p.astype(x_all.dtype), (((1,), (1,)), ((), ())),
            preferred_element_type=jnp.float32)

        # Residual "+ x": exact f32 channel softmax of this tile's columns,
        # recomputed so only one x_sm slab needs to stay resident.
        if mxu_bf16:
            x_res = _channel_softmax(
                x_ref[0, :, pl.ds(start, tn)].astype(jnp.float32))
        else:
            x_res = xm_ref[:, pl.ds(start, tn)]
        out_ref[0] = (gamma_ref[0] * out + x_res).astype(out_ref.dtype)

    out_spec = pl.BlockSpec(
        (1, C, tn), lambda b, h, t, g: (b, 0, h * tiles_per_split + t))
    if return_attention:
        def kernel(gamma_ref, x_ref, out_ref, att_ref, xm_ref):
            _body(gamma_ref, x_ref, out_ref, att_ref, xm_ref)
        out_shape = (jax.ShapeDtypeStruct((B, C, Np), x.dtype),
                     jax.ShapeDtypeStruct((B, Np, Np), att_dtype))
        out_specs = [out_spec,
                     pl.BlockSpec((1, tn, Np),
                                  lambda b, h, t, g:
                                  (b, h * tiles_per_split + t, 0))]
    else:
        def kernel(gamma_ref, x_ref, out_ref, xm_ref):
            _body(gamma_ref, x_ref, out_ref, None, xm_ref)
        out_shape = jax.ShapeDtypeStruct((B, C, Np), x.dtype)
        out_specs = out_spec

    att_hbm = B * Np * Np * att_dtype.itemsize if return_attention else 0
    cost = pl.CostEstimate(
        flops=4 * B * C * Np * Np,                     # the two MXU matmuls
        transcendentals=B * (Np * Np + 2 * C * Np),    # attention + channel exps
        bytes_accessed=B * 2 * C * Np * x_itm + att_hbm,
    )

    res = pl.pallas_call(
        kernel,
        out_shape=out_shape,
        grid_spec=pltpu.PrefetchScalarGridSpec(
            num_scalar_prefetch=1,                     # gamma lands in SMEM
            grid=(B, n_split, tiles_per_split),
            in_specs=[x_spec],
            out_specs=out_specs,
            scratch_shapes=[pltpu.VMEM((C, Np), xm_dtype)],
        ),
        compiler_params=pltpu.CompilerParams(
            dimension_semantics=("parallel", "parallel", "arbitrary"),
            vmem_limit_bytes=vmem_limit,
        ),
        cost_estimate=cost,
    )(gamma, x)

    if return_attention:
        out, att = res
        if Np != N:
            att = att[:, :N, :N]
    else:
        out, att = res, None
    if Np != N:
        out = out[:, :, :N]
    return out.reshape(B, C, H, W), att


def _pam_reference(x_nchw, gamma):
    """Pure-JAX reference mirroring the PyTorch forward (gamma >= -0.01 path)."""
    B, C, H, W = x_nchw.shape
    N = H * W
    x = jax.nn.softmax(x_nchw, axis=1)
    v = x.reshape(B, C, N)
    energy = jnp.einsum("bcn,bcm->bnm", v, v)
    att = jax.nn.softmax(energy, axis=-1)
    out = jnp.einsum("bcm,bnm->bcn", v, att).reshape(B, C, H, W)
    return gamma[0] * out + x, att


if __name__ == "__main__":
    key = jax.random.PRNGKey(0)
    B, C, H, W = 2, 4, 16, 16
    x = jax.random.normal(key, (B, C, H, W), dtype=jnp.float32)

    # 1) exact path: f32 MXU operands, exact reciprocal, f32 attention.
    gamma0 = jnp.zeros((1,), dtype=jnp.float32)        # nn.Parameter(zeros(1))
    out, att = pam_forward(x, gamma0, tn=128, mxu_bf16=False)
    out, att = jax.block_until_ready((out, att))
    ref_out, ref_att = _pam_reference(x, gamma0)
    assert out.shape == (B, C, H, W) and att.shape == (B, H * W, H * W)
    assert jnp.allclose(out, ref_out, atol=1e-5, rtol=1e-5)
    assert jnp.allclose(att, ref_att, atol=1e-5, rtol=1e-5)

    # 2) fast path: bf16 MXU + approx reciprocal + bf16 attention writeback.
    gamma1 = jnp.full((1,), 0.5, dtype=jnp.float32)
    out_f, att_f = pam_forward(x, gamma1, tn=128)
    out_f, att_f = jax.block_until_ready((out_f, att_f))
    ref_out1, ref_att1 = _pam_reference(x, gamma1)
    assert att_f.dtype == jnp.bfloat16
    assert jnp.allclose(out_f, ref_out1, atol=2e-2, rtol=2e-2)
    assert jnp.allclose(att_f.astype(jnp.float32), ref_att1, atol=2e-2, rtol=2e-2)

    # 3) B == 1: exercises the two-way tile split (second v7x TensorCore).
    x1 = jax.random.normal(jax.random.PRNGKey(1), (1, C, H, W), dtype=jnp.float32)
    out_s, att_s = pam_forward(x1, gamma1, tn=128)
    out_s, att_s = jax.block_until_ready((out_s, att_s))
    ref_out_s, ref_att_s = _pam_reference(x1, gamma1)
    assert jnp.allclose(out_s, ref_out_s, atol=2e-2, rtol=2e-2)
    assert jnp.allclose(att_s.astype(jnp.float32), ref_att_s, atol=2e-2, rtol=2e-2)

    # 4) non-128-multiple spatial size: N=100 padded/masked to 128.
    x2 = jax.random.normal(jax.random.PRNGKey(2), (1, C, 10, 10), dtype=jnp.float32)
    out_p, att_p = pam_forward(x2, gamma1)
    out_p, att_p = jax.block_until_ready((out_p, att_p))
    ref_out_p, ref_att_p = _pam_reference(x2, gamma1)
    assert out_p.shape == (1, C, 10, 10) and att_p.shape == (1, 100, 100)
    assert jnp.allclose(out_p, ref_out_p, atol=2e-2, rtol=2e-2)
    assert jnp.allclose(att_p.astype(jnp.float32), ref_att_p, atol=2e-2, rtol=2e-2)

    # 5) attention output skipped entirely (DANet discards it).
    out_n, att_n = pam_forward(x, gamma1, tn=128, return_attention=False)
    out_n = jax.block_until_ready(out_n)
    assert att_n is None
    assert jnp.allclose(out_n, ref_out1, atol=2e-2, rtol=2e-2)

    print("KERNEL_OK")
</pallas_src>

<mosaic_0001>
module attributes {stable_mosaic.version = 11 : i64} {
  func.func @kernel(%arg0: i32, %arg1: i32, %arg2: i32, %arg3: memref<1xf32, #tpu.memory_space<smem>>, %arg4: memref<1x4x256xf32, #tpu.memory_space<vmem>>, %arg5: memref<1x4x128xf32, #tpu.memory_space<vmem>>, %arg6: memref<1x128x256xf32, #tpu.memory_space<vmem>>, %arg7: memref<4x256xf32, #tpu.memory_space<vmem>>) attributes {dimension_semantics = [#tpu.dimension_semantics<parallel>, #tpu.dimension_semantics<parallel>, #tpu.dimension_semantics<arbitrary>], iteration_bounds = array<i64: 2, 1, 2>, scalar_prefetch = 1 : i64, scratch_operands = 1 : i64, tpu.core_type = #tpu.core_type<tc>, window_params = [{pipeline_mode = #tpu.pipeline_mode<synchronous>, transform_indices = @transform_0, window_bounds = array<i64: 1, 4, 256>}, {transform_indices = @transform_1, window_bounds = array<i64: 1, 4, 128>}, {transform_indices = @transform_2, window_bounds = array<i64: 1, 128, 256>}]} {
    %c0_i32 = arith.constant 0 : i32
    %0 = arith.cmpi eq, %arg2, %c0_i32 : i32
    %1 = arith.extui %0 : i1 to i32
    %c0_i32_0 = arith.constant 0 : i32
    %2 = arith.cmpi ne, %1, %c0_i32_0 : i32
    scf.if %2 {
      %c0_14 = arith.constant 0 : index
      %c0_15 = arith.constant 0 : index
      %c0_16 = arith.constant 0 : index
      %34 = vector.load %arg4[%c0_14, %c0_15, %c0_16] : memref<1x4x256xf32, #tpu.memory_space<vmem>>, vector<1x4x256xf32>
      %35 = vector.shape_cast %34 : vector<1x4x256xf32> to vector<4x256xf32>
      %cst_17 = arith.constant dense<0xFF800000> : vector<256xf32>
      %36 = vector.multi_reduction <maximumf>, %35, %cst_17 [0] : vector<4x256xf32> to vector<256xf32>
      %37 = vector.shape_cast %36 : vector<256xf32> to vector<1x256xf32>
      %38 = vector.broadcast %37 : vector<1x256xf32> to vector<4x256xf32>
      %39 = arith.subf %35, %38 : vector<4x256xf32>
      %40 = math.exp %39 : vector<4x256xf32>
      %cst_18 = arith.constant dense<0.000000e+00> : vector<256xf32>
      %41 = vector.multi_reduction <add>, %40, %cst_18 [0] : vector<4x256xf32> to vector<256xf32>
      %42 = vector.shape_cast %41 : vector<256xf32> to vector<1x256xf32>
      %43 = tpu.reciprocal %42 : vector<1x256xf32> -> vector<1x256xf32>
      %44 = vector.broadcast %43 : vector<1x256xf32> to vector<4x256xf32>
      %45 = arith.mulf %40, %44 : vector<4x256xf32>
      %c0_19 = arith.constant 0 : index
      %c0_20 = arith.constant 0 : index
      %46 = vector.load %arg7[%c0_19, %c0_20] : memref<4x256xf32, #tpu.memory_space<vmem>>, vector<4x256xf32>
      tpu.vector_store %arg7[%c0_19, %c0_20], %45 {strides = array<i32>} : memref<4x256xf32, #tpu.memory_space<vmem>>, vector<4x256xf32>,
    } else {
    }
    %c2_i32 = arith.constant 2 : i32
    %3 = arith.muli %arg1, %c2_i32 : i32
    %4 = arith.addi %3, %arg2 : i32
    %c128_i32 = arith.constant 128 : i32
    %5 = arith.muli %4, %c128_i32 : i32
    %6 = tpu.assume_multiple %5, 128 : i32
    %c0 = arith.constant 0 : index
    %c0_1 = arith.constant 0 : index
    %7 = vector.load %arg7[%c0, %c0_1] : memref<4x256xf32, #tpu.memory_space<vmem>>, vector<4x256xf32>
    %c0_2 = arith.constant 0 : index
    %8 = arith.index_cast %6 : i32 to index
    %9 = vector.load %arg7[%c0_2, %8] : memref<4x256xf32, #tpu.memory_space<vmem>>, vector<4x128xf32>
    %cst = arith.constant dense<0.000000e+00> : vector<128x256xf32>
    %10 = tpu.matmul %9, %7, %cst {dimension_numbers = #tpu.dot_dimension_numbers<[0], [0], [1], [1], [0, 1, 1, 1], [], []>} : vector<4x128xf32>, vector<4x256xf32>, vector<128x256xf32> -> vector<128x256xf32>
    %cst_3 = arith.constant dense<0xFF800000> : vector<128xf32>
    %11 = vector.multi_reduction <maximumf>, %10, %cst_3 [1] : vector<128x256xf32> to vector<128xf32>
    %12 = vector.shape_cast %11 : vector<128xf32> to vector<128x1xf32>
    %13 = vector.broadcast %12 : vector<128x1xf32> to vector<128x256xf32>
    %14 = arith.subf %10, %13 : vector<128x256xf32>
    %15 = math.exp %14 : vector<128x256xf32>
    %cst_4 = arith.constant dense<0.000000e+00> : vector<128xf32>
    %16 = vector.multi_reduction <add>, %15, %cst_4 [1] : vector<128x256xf32> to vector<128xf32>
    %17 = vector.shape_cast %16 : vector<128xf32> to vector<128x1xf32>
    %18 = tpu.reciprocal %17 : vector<128x1xf32> -> vector<128x1xf32>
    %19 = vector.broadcast %18 : vector<128x1xf32> to vector<128x256xf32>
    %20 = arith.mulf %15, %19 : vector<128x256xf32>
    %c0_5 = arith.constant 0 : index
    %c0_6 = arith.constant 0 : index
    %c0_7 = arith.constant 0 : index
    %21 = vector.load %arg6[%c0_5, %c0_6, %c0_7] : memref<1x128x256xf32, #tpu.memory_space<vmem>>, vector<1x128x256xf32>
    %22 = vector.shape_cast %21 : vector<1x128x256xf32> to vector<128x256xf32>
    %23 = vector.shape_cast %20 : vector<128x256xf32> to vector<1x128x256xf32>
    tpu.vector_store %arg6[%c0_5, %c0_6, %c0_7], %23 {strides = array<i32>} : memref<1x128x256xf32, #tpu.memory_space<vmem>>, vector<1x128x256xf32>,
    %cst_8 = arith.constant dense<0.000000e+00> : vector<4x128xf32>
    %24 = tpu.matmul %7, %20, %cst_8 {dimension_numbers = #tpu.dot_dimension_numbers<[1], [1], [0], [0], [0, 0, 1, 0], [], []>} : vector<4x256xf32>, vector<128x256xf32>, vector<4x128xf32> -> vector<4x128xf32>
    %c0_9 = arith.constant 0 : index
    %25 = arith.index_cast %6 : i32 to index
    %26 = vector.load %arg7[%c0_9, %25] : memref<4x256xf32, #tpu.memory_space<vmem>>, vector<4x128xf32>
    %c0_10 = arith.constant 0 : index
    %27 = memref.load %arg3[%c0_10] : memref<1xf32, #tpu.memory_space<smem>>
    %28 = vector.broadcast %27 : f32 to vector<4x128xf32>
    %29 = arith.mulf %28, %24 : vector<4x128xf32>
    %30 = arith.addf %29, %26 : vector<4x128xf32>
    %c0_11 = arith.constant 0 : index
    %c0_12 = arith.constant 0 : index
    %c0_13 = arith.constant 0 : index
    %31 = vector.load %arg5[%c0_11, %c0_12, %c0_13] : memref<1x4x128xf32, #tpu.memory_space<vmem>>, vector<1x4x128xf32>
    %32 = vector.shape_cast %31 : vector<1x4x128xf32> to vector<4x128xf32>
    %33 = vector.shape_cast %30 : vector<4x128xf32> to vector<1x4x128xf32>
    tpu.vector_store %arg5[%c0_11, %c0_12, %c0_13], %33 {strides = array<i32>} : memref<1x4x128xf32, #tpu.memory_space<vmem>>, vector<1x4x128xf32>,
    return
  }
  func.func @transform_0(%arg0: i32, %arg1: i32, %arg2: i32, %arg3: memref<1xf32, #tpu.memory_space<smem>>) -> (i32, i32, i32) {
    %c0_i32 = arith.constant 0 : i32
    %c0_i32_0 = arith.constant 0 : i32
    %c0_i32_1 = arith.constant 0 : i32
    return %arg0, %c0_i32, %c0_i32_0 : i32, i32, i32
  }
  func.func @transform_1(%arg0: i32, %arg1: i32, %arg2: i32, %arg3: memref<1xf32, #tpu.memory_space<smem>>) -> (i32, i32, i32) {
    %c2_i32 = arith.constant 2 : i32
    %0 = arith.muli %arg1, %c2_i32 : i32
    %1 = arith.addi %0, %arg2 : i32
    %c0_i32 = arith.constant 0 : i32
    %c0_i32_0 = arith.constant 0 : i32
    return %arg0, %c0_i32, %1 : i32, i32, i32
  }
  func.func @transform_2(%arg0: i32, %arg1: i32, %arg2: i32, %arg3: memref<1xf32, #tpu.memory_space<smem>>) -> (i32, i32, i32) {
    %c2_i32 = arith.constant 2 : i32
    %0 = arith.muli %arg1, %c2_i32 : i32
    %1 = arith.addi %0, %arg2 : i32
    %c0_i32 = arith.constant 0 : i32
    %c0_i32_0 = arith.constant 0 : i32
    return %arg0, %1, %c0_i32 : i32, i32, i32
  }
}

</mosaic_0001>

<llo_original>
// kernel: tpu_custom_call.1
$region0: #{tpu_custom_call.1}
  #allocation0 [shape = 'u32[]', space=smem, size = 0x4, offset = 0x4, fixed_abs, tag = 'smem constant byte address 0x4 - core index']
  #allocation1 [shape = 'u32[144,128]{1,0:T(1,128)}', space=vmem, size = 0x12000, scoped, tag = 'internal scratch']
  #allocation2 [shape = 'f32[4,256]{1,0:T(4,128)}', space=vmem, size = 0x1000, scoped, tag = 'scratch operand']
  #allocation3 [shape = 's32[1]{0}', space=sflag, size = 0x4, scoped, tag = 'scoped memory for tpu_custom_call.1']
  #allocation4 [shape = 'f32[1]{0:T(128)S(6)}', space=smem, size = 0x200, scoped, tag = 'prefetched SMEM operand 0']
  %s0 = inlined_call_operand.<no memory space> [shape: f32[1], index: 0, kind: input, shape index: {}]
  %s1 = inlined_call_operand.hbm [shape: f32[2,4,256], index: 1, kind: input, shape index: {}]
  %s2 = inlined_call_operand.hbm [shape: f32[2,4,256], index: 2, kind: output, shape index: {0}]
  %s3 = inlined_call_operand.hbm [shape: f32[2,256,256], index: 3, kind: output, shape index: {1}]
  %4 = xla_tuple %s2, %s3
  %s5 = sld [smem:[#allocation0]]
  $region53: #{tpu_custom_call.1} parent=0
    _
  %s7 = ssub.s32 1, %s5
  %s8 = scalar_select 0, %s7, %s5
  %9 = sst [smem:[#allocation4]] %s0
  $region1: #{tpu_custom_call.1} parent=0
    #allocation5 [shape = 'u8[4096]{0}', space=vmem, size = 0x1000, scoped, tag = 'input window, operand 1, single buffered']
    #allocation6 [shape = 's32[2]{0}', space=sflag, size = 0x8, scoped, tag = 'scoped memory for tpu_custom_call.1']
    #allocation7 [shape = 's32[2]{0}', space=sflag, size = 0x8, scoped, tag = 'scoped memory for tpu_custom_call.1']
    #allocation8 [shape = 'u8[4096]{0}', space=vmem, size = 0x1000, scoped, tag = 'output window, operand 0']
    #allocation9 [shape = 'u8[262144]{0}', space=vmem, size = 0x40000, scoped, tag = 'output window, operand 1']
    #allocation10 [shape = 's32[2]{0}', space=sflag, size = 0x8, scoped, tag = 'scoped memory for tpu_custom_call.1']
    %10 = vsyncpa [#allocation6], 0
    %11 = vsyncpa [#allocation7], 0
    %s12 = scalar_lea.sflag [#allocation7], 1
    %13 = vsyncpa %s12, 0
    %14 = vsyncpa [#allocation10], 0
    %s15 = scalar_lea.sflag [#allocation10], 1
    %16 = vsyncpa %s15, 0
    loop: start=0, step=1, limit=6
    $region2: #{tpu_custom_call.1} parent=1 // loop_pre_header
      _
    $region3: #{tpu_custom_call.1} parent=1 // loop_header
      %s18 = sphi 0, %s22
      %p19 = scmp.ge.s32.totalorder %s18, 6
      %s25 = sphi 0, %s44
      %s26 = sphi 0, %s40
      %s27 = sphi 0, %s36
      %s28 = sphi 0, %s25
      %s29 = sphi 0, %s26
      %s30 = sphi 0, %s27
      %s31 = sphi 0, %s28
      %s32 = sphi 0, %s29
      %s33 = sphi 0, %s30
      %s47 = sphi 0, %s49
      %s50 = sphi 0, %s47
      %s51 = sphi 0, %s50
      %s67 = sphi 0, %s51
      %s79 = sphi 0, %s81
      %s82 = sphi 0, %s79
      %s83 = sphi 0, %s82
      %s99 = sphi 0, %s83
      %s111 = sphi 0, %s113
      %s114 = sphi 0, %s111
      %s115 = sphi 0, %s114
      %s131 = sphi 0, %s115
    $region4: #{tpu_custom_call.1} parent=1 // loop_header_branch
      %21 = sbr.rel (%p19) target = $region8
    $region5: #{tpu_custom_call.1} parent=1 // loop_body
      %s23 = ssub.s32 %s18, 1
      %s24 = ssub.s32 %s18, 2
      %s34 = sadd.s32 1, %s27
      %p35 = scmp.ge.s32.totalorder %s34, 2
      %s36 = scalar_select %p35, 0, %s34
      %s37 = sadd.s32 1, %s26
      %s38 = scalar_select %p35, %s37, %s26
      %p39 = scmp.ge.s32.totalorder %s38, 1
      %s40 = scalar_select %p39, 0, %s38
      %s41 = sadd.s32 1, %s25
      %s42 = scalar_select %p39, %s41, %s25
      %p43 = scmp.ge.s32.totalorder %s42, 2
      %s44 = scalar_select %p43, 0, %s42
      %s45 = ssub.s32 %s25, %s44
      %p46 = scmp.eq.s32.totalorder %s45, 0
      %s48 = sadd.s32 %s47, 1
      %s49 = scalar_select %p46, %s47, %s48
      %p52 = pneg %p46
      %p53 = scmp.eq.s32.totalorder %s18, 3
      %p54 = por %p52, %p53
      %p55 = scmp.ne.s32.totalorder %s47, %s50
      %p56 = scmp.eq.s32.totalorder %s18, 0
      %p57 = por %p55, %p56
      %p58 = scmp.ne.s32.totalorder %s47, %s50
      %p59 = scmp.eq.s32.totalorder %s23, 3
      %p60 = por %p58, %p59
      %p61 = scmp.ne.s32.totalorder %s50, %s51
      %p62 = scmp.eq.s32.totalorder %s23, 0
      %p63 = por %p61, %p62
      %p64 = scmp.ne.s32.totalorder %s50, %s51
      %p65 = scmp.eq.s32.totalorder %s24, 3
      %p66 = por %p64, %p65
      %p68 = scmp.ne.s32.totalorder %s51, %s67
      %p69 = scmp.eq.s32.totalorder %s24, 0
      %p70 = por %p68, %p69
      %s71 = smul.u32 %s26, 2
      %s72 = sadd.s32 %s71, %s27
      %s73 = smul.u32 %s40, 2
      %s74 = sadd.s32 %s73, %s36
      %s75 = ssub.s32 %s25, %s44
      %s76 = ssub.s32 %s72, %s74
      %s77 = sor.u32 %s75, %s76
      %p78 = scmp.eq.s32.totalorder %s77, 0
      %s80 = sadd.s32 %s79, 1
      %s81 = scalar_select %p78, %s79, %s80
      %p84 = pneg %p78
      %p85 = scmp.eq.s32.totalorder %s18, 3
      %p86 = por %p84, %p85
      %p87 = scmp.ne.s32.totalorder %s79, %s82
      %p88 = scmp.eq.s32.totalorder %s18, 0
      %p89 = por %p87, %p88
      %p90 = scmp.ne.s32.totalorder %s79, %s82
      %p91 = scmp.eq.s32.totalorder %s23, 3
      %p92 = por %p90, %p91
      %p93 = scmp.ne.s32.totalorder %s82, %s83
      %p94 = scmp.eq.s32.totalorder %s23, 0
      %p95 = por %p93, %p94
      %p96 = scmp.ne.s32.totalorder %s82, %s83
      %p97 = scmp.eq.s32.totalorder %s24, 3
      %p98 = por %p96, %p97
      %p100 = scmp.ne.s32.totalorder %s83, %s99
      %p101 = scmp.eq.s32.totalorder %s24, 0
      %p102 = por %p100, %p101
      %s103 = smul.u32 %s26, 2
      %s104 = sadd.s32 %s103, %s27
      %s105 = smul.u32 %s40, 2
      %s106 = sadd.s32 %s105, %s36
      %s107 = ssub.s32 %s25, %s44
      %s108 = ssub.s32 %s104, %s106
      %s109 = sor.u32 %s107, %s108
      %p110 = scmp.eq.s32.totalorder %s109, 0
      %s112 = sadd.s32 %s111, 1
      %s113 = scalar_select %p110, %s111, %s112
      %p116 = pneg %p110
      %p117 = scmp.eq.s32.totalorder %s18, 3
      %p118 = por %p116, %p117
      %p119 = scmp.ne.s32.totalorder %s111, %s114
      %p120 = scmp.eq.s32.totalorder %s18, 0
      %p121 = por %p119, %p120
      %p122 = scmp.ne.s32.totalorder %s111, %s114
      %p123 = scmp.eq.s32.totalorder %s23, 3
      %p124 = por %p122, %p123
      %p125 = scmp.ne.s32.totalorder %s114, %s115
      %p126 = scmp.eq.s32.totalorder %s23, 0
      %p127 = por %p125, %p126
      %p128 = scmp.ne.s32.totalorder %s114, %s115
      %p129 = scmp.eq.s32.totalorder %s24, 3
      %p130 = por %p128, %p129
      %p132 = scmp.ne.s32.totalorder %s115, %s131
      %p133 = scmp.eq.s32.totalorder %s24, 0
      %p134 = por %p132, %p133
      %p135 = scmp.le.s32.totalorder 1, %s18
      %p136 = scmp.lt.s32.totalorder %s18, 5
      %p137 = pnand %p135, %p136
      %p138 = pneg %p137
      // Predicated region
      $region9: #{tpu_custom_call.1} parent=5 // pred_check
        _
      $region10: #{tpu_custom_call.1} parent=5 // pred_check_branch
        %140 = sbr.rel (%p137) target = $region12
      $region11: #{tpu_custom_call.1} parent=5 // pred_region
        %s141 = ssub.s32 %s18, 1
        // Predicated region
        $region13: #{tpu_custom_call.1} parent=11 // pred_check
          %p142 = pneg %p63
        $region14: #{tpu_custom_call.1} parent=11 // pred_check_branch
          %144 = sbr.rel (%p142) target = $region16
        $region15: #{tpu_custom_call.1} parent=11 // pred_region
          %s146 = ssub.s32 128, 128
          %147 = vsyncadd [#allocation6], %s146
          %s148 = smul.addr %s28, 2
          %s149 = smul.addr %s148, 64
          %s150 = scalar_lea.hbm %s1, %s149
          %s152 = sshll.u32 [#allocation5], 4
          %s153 = int_to_ptr.vmem [resolvable:$true] %s152
          %155 = dma.hbm_to_vmem [thread:$0]  %s150, 128, %s153, [#allocation6]
        $region16: #{tpu_custom_call.1} parent=11 // pred_fallthru
          _
      $region12: #{tpu_custom_call.1} parent=5 // pred_fallthru
        _
      %p156 = scmp.lt.s32.totalorder %s18, 4
      // Predicated region
      $region17: #{tpu_custom_call.1} parent=5 // pred_check
        %p157 = pneg %p156
      $region18: #{tpu_custom_call.1} parent=5 // pred_check_branch
        %159 = sbr.rel (%p157) target = $region20
      $region19: #{tpu_custom_call.1} parent=5 // pred_region
        _
      $region20: #{tpu_custom_call.1} parent=5 // pred_fallthru
        _
      %p160 = scmp.le.s32.totalorder 1, %s18
      %p161 = scmp.lt.s32.totalorder %s18, 5
      %p162 = pnand %p160, %p161
      %p163 = pneg %p162
      // Predicated region
      $region21: #{tpu_custom_call.1} parent=5 // pred_check
        _
      $region22: #{tpu_custom_call.1} parent=5 // pred_check_branch
        %165 = sbr.rel (%p162) target = $region24
      $region23: #{tpu_custom_call.1} parent=5 // pred_region
        %s166 = ssub.s32 %s18, 1
        // Predicated region
        $region25: #{tpu_custom_call.1} parent=23 // pred_check
          %p167 = pneg %p63
        $region26: #{tpu_custom_call.1} parent=23 // pred_check_branch
          %169 = sbr.rel (%p167) target = $region28
        $region27: #{tpu_custom_call.1} parent=23 // pred_region
          %170 = dma.done [#allocation6], 128
        $region28: #{tpu_custom_call.1} parent=23 // pred_fallthru
          _
        %p171 = pneg %p63
        %p172 = pneg %p60
        %p173 = pneg %p95
        %p174 = pneg %p92
        %s175 = sand.u32 %s82, 1
        %s176 = scalar_lea.sflag [#allocation7], %s175
        %s177 = sand.u32 %s82, 1
        %s178 = smul.addr %s177, 4
        %s179 = scalar_lea.vmem [#allocation8], %s178
        %p180 = pneg %p127
        %p181 = pneg %p124
        %s182 = sand.u32 %s114, 1
        %s183 = scalar_lea.sflag [#allocation10], %s182
        %s184 = sand.u32 %s114, 1
        %s185 = smul.addr %s184, 256
        %s186 = scalar_lea.vmem [#allocation9], %s185
        %s187 = smul.u32 %s29, 2
        %s188 = sadd.s32 %s187, %s30
        %s189 = smul.u32 %s29, 2
        %s190 = sadd.s32 %s189, %s30
        %s191 = smul.u32 16, %s190
        %p192 = scmp.eq.s32.totalorder %s30, 0
        // Predicated region
        $region29: #{tpu_custom_call.1} parent=23 // pred_check
          %p193 = pneg %p192
        $region30: #{tpu_custom_call.1} parent=23 // pred_check_branch
          %195 = sbr.rel (%p193) target = $region32
        $region31: #{tpu_custom_call.1} parent=23 // pred_region
          %v196 = vld [vmem:[#allocation5] sm:$0xff]
          %v198 = vcombine.high %v196, %v196
          %vm200 = vcmask 1043456
          %v201 = vsel %vm200, %v196, -inf
          %v202 = vrot.slane %v201, 4
          %v203 = vmax.f32 %v201, %v202
          %v204 = vrot.slane %v203, 2
          %v205 = vmax.f32 %v203, %v204
          %v206 = vrot.slane %v205, 1
          %v207 = vmax.f32 %v205, %v206
          %v208 = vsel %vm200, %v198, -inf
          %v209 = vrot.slane %v208, 4
          %v210 = vmax.f32 %v208, %v209
          %v211 = vrot.slane %v210, 2
          %v212 = vmax.f32 %v210, %v211
          %v213 = vrot.slane %v212, 1
          %v214 = vmax.f32 %v212, %v213
          %v217 = vcombine.low %v207, %v214
          %v219 = vsub.f32 %v196, %v217
          %v220 = vmul.f32 %v219, 1.442695
          %v221 = vpow.pop %v220
          %v223 = vcombine.high %v221, %v221
          %v225 = vsel %vm200, %v221, 0.0
          %v226 = vrot.slane %v225, 4
          %v227 = vadd.f32 %v225, %v226
          %v228 = vrot.slane %v227, 2
          %v229 = vadd.f32 %v227, %v228
          %v230 = vrot.slane %v229, 1
          %v231 = vadd.f32 %v229, %v230
          %v232 = vsel %vm200, %v223, 0.0
          %v233 = vrot.slane %v232, 4
          %v234 = vadd.f32 %v232, %v233
          %v235 = vrot.slane %v234, 2
          %v236 = vadd.f32 %v234, %v235
          %v237 = vrot.slane %v236, 1
          %v238 = vadd.f32 %v236, %v237
          %v239 = vrcp.pop %v231
          %v240 = vrcp.pop %v238
          %v243 = vcombine.low %v239, %v240
          %v245 = vmul.f32 %v221, %v243
          %246 = vst [vmem:[#allocation2] sm:$0xff] %v245
        $region32: #{tpu_custom_call.1} parent=23 // pred_fallthru
          _
        %s247 = smul.u32 %s29, 2
        %s248 = sadd.s32 %s247, %s30
        %s249 = smul.u32 %s248, 128
        %v250 = vld [vmem:[#allocation2] sm:$0xff]
        %s251 = sshra.s32 %s249, 7
        %s252 = sand.u32 %s249, 127
        %s253 = smul.addr %s251, 4
        %s254 = scalar_lea.vmem [#allocation2], %s253
        %v255 = vld [vmem:[%s254] sm:$0xf]
        %256 = vxpose.xlu0.b32.start [1/16] %v255, 128
        %257 = vxpose.xlu0.b32.cont [2/16] 0.0, 128
        %258 = vxpose.xlu0.b32.cont [3/16] 0.0, 128
        %259 = vxpose.xlu0.b32.cont [4/16] 0.0, 128
        %260 = vxpose.xlu0.b32.cont [5/16] 0.0, 128
        %261 = vxpose.xlu0.b32.cont [6/16] 0.0, 128
        %262 = vxpose.xlu0.b32.cont [7/16] 0.0, 128
        %263 = vxpose.xlu0.b32.cont [8/16] 0.0, 128
        %264 = vxpose.xlu0.b32.cont [9/16] 0.0, 128
        %265 = vxpose.xlu0.b32.cont [10/16] 0.0, 128
        %266 = vxpose.xlu0.b32.cont [11/16] 0.0, 128
        %267 = vxpose.xlu0.b32.cont [12/16] 0.0, 128
        %268 = vxpose.xlu0.b32.cont [13/16] 0.0, 128
        %269 = vxpose.xlu0.b32.cont [14/16] 0.0, 128
        %270 = vxpose.xlu0.b32.cont [15/16] 0.0, 128
        %271 = vxpose.xlu0.b32.end [16/16] 0.0, 128
        %v272 = vpop.trf.xlu0
        %v273 = vpop.trf.xlu0
        %v274 = vpop.trf.xlu0
        %v275 = vpop.trf.xlu0
        %v276 = vpop.trf.xlu0
        %v277 = vpop.trf.xlu0
        %v278 = vpop.trf.xlu0
        %v279 = vpop.trf.xlu0
        %v280 = vpop.trf.xlu0
        %v281 = vpop.trf.xlu0
        %v282 = vpop.trf.xlu0
        %v283 = vpop.trf.xlu0
        %v284 = vpop.trf.xlu0
        %v285 = vpop.trf.xlu0
        %v286 = vpop.trf.xlu0
        %v287 = vpop.trf.xlu0
        %v289 = vcombine.high %v250, %v250
        %vm290 = vcmask 31744
        %v292 = vsel %vm290, %v272, 0
        %v295 = vsel %vm290, %v273, 0
        %v298 = vsel %vm290, %v274, 0
        %v301 = vsel %vm290, %v275, 0
        %v304 = vsel %vm290, %v276, 0
        %v307 = vsel %vm290, %v277, 0
        %v310 = vsel %vm290, %v278, 0
        %v313 = vsel %vm290, %v279, 0
        %v316 = vsel %vm290, %v280, 0
        %v319 = vsel %vm290, %v281, 0
        %v322 = vsel %vm290, %v282, 0
        %v325 = vsel %vm290, %v283, 0
        %v328 = vsel %vm290, %v284, 0
        %v331 = vsel %vm290, %v285, 0
        %v334 = vsel %vm290, %v286, 0
        %v337 = vsel %vm290, %v287, 0
        %vm339 = vcmask 1043456
        %v340 = vsel %vm339, %v250, 0
        %v342 = vsel %vm339, %v289, 0
        %344 = vmatprep.subr.mxu0 %v342
        %345 = vmatpush1.msra.mxu0 %v340
        %346 = vmatprep.subr.mxu0 0.0
        %347 = vmatpush1.msra.mxu0 0.0
        %348 = vmatprep.subr.mxu0 0.0
        %349 = vmatpush1.msra.mxu0 0.0
        %350 = vmatprep.subr.mxu0 0.0
        %351 = vmatpush1.msra.mxu0 0.0
        %352 = vmatprep.subr.mxu0 0.0
        %353 = vmatpush1.msra.mxu0 0.0
        %354 = vmatprep.subr.mxu0 0.0
        %355 = vmatpush1.msra.mxu0 0.0
        %356 = vmatprep.subr.mxu0 0.0
        %357 = vmatpush1.msra.mxu0 0.0
        %358 = vmatprep.subr.mxu0 0.0
        %359 = vmatpush1.msra.mxu0 0.0
        %360 = vmatprep.subr.mxu0 0.0
        %361 = vmatpush1.msra.mxu0 0.0
        %362 = vmatprep.subr.mxu0 0.0
        %363 = vmatpush1.msra.mxu0 0.0
        %364 = vmatprep.subr.mxu0 0.0
        %365 = vmatpush1.msra.mxu0 0.0
        %366 = vmatprep.subr.mxu0 0.0
        %367 = vmatpush1.msra.mxu0 0.0
        %368 = vmatprep.subr.mxu0 0.0
        %369 = vmatpush1.msra.mxu0 0.0
        %370 = vmatprep.subr.mxu0 0.0
        %371 = vmatpush1.msra.mxu0 0.0
        %372 = vmatprep.subr.mxu0 0.0
        %373 = vmatpush1.msra.mxu0 0.0
        %374 = vmatprep.subr.mxu0 0.0
        %375 = vmatpush1.msra.mxu0 0.0
        %376 = vmatprep.subr.mxu0 0.0
        %377 = vmatpush1.msra.mxu0 0.0
        %378 = vmatprep.subr.mxu0 0.0
        %379 = vmatpush1.msra.mxu0 0.0
        %380 = vmatprep.subr.mxu0 0.0
        %381 = vmatpush1.msra.mxu0 0.0
        %382 = vmatprep.subr.mxu0 0.0
        %383 = vmatpush1.msra.mxu0 0.0
        %384 = vmatprep.subr.mxu0 0.0
        %385 = vmatpush1.msra.mxu0 0.0
        %386 = vmatprep.subr.mxu0 0.0
        %387 = vmatpush1.msra.mxu0 0.0
        %388 = vmatprep.subr.mxu0 0.0
        %389 = vmatpush1.msra.mxu0 0.0
        %390 = vmatprep.subr.mxu0 0.0
        %391 = vmatpush1.msra.mxu0 0.0
        %392 = vmatprep.subr.mxu0 0.0
        %393 = vmatpush1.msra.mxu0 0.0
        %394 = vmatprep.subr.mxu0 0.0
        %395 = vmatpush1.msra.mxu0 0.0
        %396 = vmatprep.subr.mxu0 0.0
        %397 = vmatpush1.msra.mxu0 0.0
        %398 = vmatprep.subr.mxu0 0.0
        %399 = vmatpush1.msra.mxu0 0.0
        %400 = vmatprep.subr.mxu0 0.0
        %401 = vmatpush1.msra.mxu0 0.0
        %402 = vmatprep.subr.mxu0 0.0
        %403 = vmatpush1.msra.mxu0 0.0
        %404 = vmatprep.subr.mxu0 0.0
        %405 = vmatpush1.msra.mxu0 0.0
        %406 = vmatprep.subr.mxu0 0.0
        %407 = vmatpush1.msra.mxu0 0.0
        %408 = vmatprep.mubr.f32.mxu0 0.0
        %409 = vmatmul.mubr.f32.gmra.mrb[0].mxu0 %v292
        %v410 = vpop.f32.mrb[0].mxu0
        %v411 = vadd.f32 0.0, %v410
        %v412 = vpop.f32.mrb[0].mxu0
        %v413 = vadd.f32 0.0, %v412
        %414 = vmatprep.mubr.f32.mxu0 0.0
        %415 = vmatmul.mubr.f32.gmra.mrb[0].mxu0 %v295
        %v416 = vpop.f32.mrb[0].mxu0
        %v417 = vadd.f32 0.0, %v416
        %v418 = vpop.f32.mrb[0].mxu0
        %v419 = vadd.f32 0.0, %v418
        %420 = vmatprep.mubr.f32.mxu0 0.0
        %421 = vmatmul.mubr.f32.gmra.mrb[0].mxu0 %v298
        %v422 = vpop.f32.mrb[0].mxu0
        %v423 = vadd.f32 0.0, %v422
        %v424 = vpop.f32.mrb[0].mxu0
        %v425 = vadd.f32 0.0, %v424
        %426 = vmatprep.mubr.f32.mxu0 0.0
        %427 = vmatmul.mubr.f32.gmra.mrb[0].mxu0 %v301
        %v428 = vpop.f32.mrb[0].mxu0
        %v429 = vadd.f32 0.0, %v428
        %v430 = vpop.f32.mrb[0].mxu0
        %v431 = vadd.f32 0.0, %v430
        %432 = vmatprep.mubr.f32.mxu0 0.0
        %433 = vmatmul.mubr.f32.gmra.mrb[0].mxu0 %v304
        %v434 = vpop.f32.mrb[0].mxu0
        %v435 = vadd.f32 0.0, %v434
        %v436 = vpop.f32.mrb[0].mxu0
        %v437 = vadd.f32 0.0, %v436
        %438 = vmatprep.mubr.f32.mxu0 0.0
        %439 = vmatmul.mubr.f32.gmra.mrb[0].mxu0 %v307
        %v440 = vpop.f32.mrb[0].mxu0
        %v441 = vadd.f32 0.0, %v440
        %v442 = vpop.f32.mrb[0].mxu0
        %v443 = vadd.f32 0.0, %v442
        %444 = vmatprep.mubr.f32.mxu0 0.0
        %445 = vmatmul.mubr.f32.gmra.mrb[0].mxu0 %v310
        %v446 = vpop.f32.mrb[0].mxu0
        %v447 = vadd.f32 0.0, %v446
        %v448 = vpop.f32.mrb[0].mxu0
        %v449 = vadd.f32 0.0, %v448
        %450 = vmatprep.mubr.f32.mxu0 0.0
        %451 = vmatmul.mubr.f32.gmra.mrb[0].mxu0 %v313
        %v452 = vpop.f32.mrb[0].mxu0
        %v453 = vadd.f32 0.0, %v452
        %v454 = vpop.f32.mrb[0].mxu0
        %v455 = vadd.f32 0.0, %v454
        %456 = vmatprep.mubr.f32.mxu0 0.0
        %457 = vmatmul.mubr.f32.gmra.mrb[0].mxu0 %v316
        %v458 = vpop.f32.mrb[0].mxu0
        %v459 = vadd.f32 0.0, %v458
        %v460 = vpop.f32.mrb[0].mxu0
        %v461 = vadd.f32 0.0, %v460
        %462 = vmatprep.mubr.f32.mxu0 0.0
        %463 = vmatmul.mubr.f32.gmra.mrb[0].mxu0 %v319
        %v464 = vpop.f32.mrb[0].mxu0
        %v465 = vadd.f32 0.0, %v464
        %v466 = vpop.f32.mrb[0].mxu0
        %v467 = vadd.f32 0.0, %v466
        %468 = vmatprep.mubr.f32.mxu0 0.0
        %469 = vmatmul.mubr.f32.gmra.mrb[0].mxu0 %v322
        %v470 = vpop.f32.mrb[0].mxu0
        %v471 = vadd.f32 0.0, %v470
        %v472 = vpop.f32.mrb[0].mxu0
        %v473 = vadd.f32 0.0, %v472
        %474 = vmatprep.mubr.f32.mxu0 0.0
        %475 = vmatmul.mubr.f32.gmra.mrb[0].mxu0 %v325
        %v476 = vpop.f32.mrb[0].mxu0
        %v477 = vadd.f32 0.0, %v476
        %v478 = vpop.f32.mrb[0].mxu0
        %v479 = vadd.f32 0.0, %v478
        %480 = vmatprep.mubr.f32.mxu0 0.0
        %481 = vmatmul.mubr.f32.gmra.mrb[0].mxu0 %v328
        %v482 = vpop.f32.mrb[0].mxu0
        %v483 = vadd.f32 0.0, %v482
        %v484 = vpop.f32.mrb[0].mxu0
        %v485 = vadd.f32 0.0, %v484
        %486 = vmatprep.mubr.f32.mxu0 0.0
        %487 = vmatmul.mubr.f32.gmra.mrb[0].mxu0 %v331
        %v488 = vpop.f32.mrb[0].mxu0
        %v489 = vadd.f32 0.0, %v488
        %v490 = vpop.f32.mrb[0].mxu0
        %v491 = vadd.f32 0.0, %v490
        %492 = vmatprep.mubr.f32.mxu0 0.0
        %493 = vmatmul.mubr.f32.gmra.mrb[0].mxu0 %v334
        %v494 = vpop.f32.mrb[0].mxu0
        %v495 = vadd.f32 0.0, %v494
        %v496 = vpop.f32.mrb[0].mxu0
        %v497 = vadd.f32 0.0, %v496
        %498 = vmatprep.mubr.f32.mxu0 0.0
        %499 = vmatmul.mubr.f32.gmra.mrb[0].mxu0 %v337
        %v500 = vpop.f32.mrb[0].mxu0
        %v501 = vadd.f32 0.0, %v500
        %v502 = vpop.f32.mrb[0].mxu0
        %v503 = vadd.f32 0.0, %v502
        %504 = vdwg.mxu0
        %v505 = vmax.f32 %v411, %v413
        %506 = vmax.xlane.f32.xlu0 %v505
        %v507 = vpop.xlane.xlu0 %506
        %v508 = vmax.f32 %v417, %v419
        %509 = vmax.xlane.f32.xlu0 %v508
        %v510 = vpop.xlane.xlu0 %509
        %v511 = vmax.f32 %v423, %v425
        %512 = vmax.xlane.f32.xlu0 %v511
        %v513 = vpop.xlane.xlu0 %512
        %v514 = vmax.f32 %v429, %v431
        %515 = vmax.xlane.f32.xlu0 %v514
        %v516 = vpop.xlane.xlu0 %515
        %v517 = vmax.f32 %v435, %v437
        %518 = vmax.xlane.f32.xlu0 %v517
        %v519 = vpop.xlane.xlu0 %518
        %v520 = vmax.f32 %v441, %v443
        %521 = vmax.xlane.f32.xlu0 %v520
        %v522 = vpop.xlane.xlu0 %521
        %v523 = vmax.f32 %v447, %v449
        %524 = vmax.xlane.f32.xlu0 %v523
        %v525 = vpop.xlane.xlu0 %524
        %v526 = vmax.f32 %v453, %v455
        %527 = vmax.xlane.f32.xlu0 %v526
        %v528 = vpop.xlane.xlu0 %527
        %v529 = vmax.f32 %v459, %v461
        %530 = vmax.xlane.f32.xlu0 %v529
        %v531 = vpop.xlane.xlu0 %530
        %v532 = vmax.f32 %v465, %v467
        %533 = vmax.xlane.f32.xlu0 %v532
        %v534 = vpop.xlane.xlu0 %533
        %v535 = vmax.f32 %v471, %v473
        %536 = vmax.xlane.f32.xlu0 %v535
        %v537 = vpop.xlane.xlu0 %536
        %v538 = vmax.f32 %v477, %v479
        %539 = vmax.xlane.f32.xlu0 %v538
        %v540 = vpop.xlane.xlu0 %539
        %v541 = vmax.f32 %v483, %v485
        %542 = vmax.xlane.f32.xlu0 %v541
        %v543 = vpop.xlane.xlu0 %542
        %v544 = vmax.f32 %v489, %v491
        %545 = vmax.xlane.f32.xlu0 %v544
        %v546 = vpop.xlane.xlu0 %545
        %v547 = vmax.f32 %v495, %v497
        %548 = vmax.xlane.f32.xlu0 %v547
        %v549 = vpop.xlane.xlu0 %548
        %v550 = vmax.f32 %v501, %v503
        %551 = vmax.xlane.f32.xlu0 %v550
        %v552 = vpop.xlane.xlu0 %551
        %v553 = vsub.f32 %v411, %v507
        %v554 = vsub.f32 %v413, %v507
        %v555 = vsub.f32 %v417, %v510
        %v556 = vsub.f32 %v419, %v510
        %v557 = vsub.f32 %v423, %v513
        %v558 = vsub.f32 %v425, %v513
        %v559 = vsub.f32 %v429, %v516
        %v560 = vsub.f32 %v431, %v516
        %v561 = vsub.f32 %v435, %v519
        %v562 = vsub.f32 %v437, %v519
        %v563 = vsub.f32 %v441, %v522
        %v564 = vsub.f32 %v443, %v522
        %v565 = vsub.f32 %v447, %v525
        %v566 = vsub.f32 %v449, %v525
        %v567 = vsub.f32 %v453, %v528
        %v568 = vsub.f32 %v455, %v528
        %v569 = vsub.f32 %v459, %v531
        %v570 = vsub.f32 %v461, %v531
        %v571 = vsub.f32 %v465, %v534
        %v572 = vsub.f32 %v467, %v534
        %v573 = vsub.f32 %v471, %v537
        %v574 = vsub.f32 %v473, %v537
        %v575 = vsub.f32 %v477, %v540
        %v576 = vsub.f32 %v479, %v540
        %v577 = vsub.f32 %v483, %v543
        %v578 = vsub.f32 %v485, %v543
        %v579 = vsub.f32 %v489, %v546
        %v580 = vsub.f32 %v491, %v546
        %v581 = vsub.f32 %v495, %v549
        %v582 = vsub.f32 %v497, %v549
        %v583 = vsub.f32 %v501, %v552
        %v584 = vsub.f32 %v503, %v552
        %v585 = vmul.f32 %v553, 1.442695
        %v586 = vpow.pop %v585
        %v587 = vmul.f32 %v554, 1.442695
        %v588 = vpow.pop %v587
        %v589 = vmul.f32 %v555, 1.442695
        %v590 = vpow.pop %v589
        %v591 = vmul.f32 %v556, 1.442695
        %v592 = vpow.pop %v591
        %v593 = vmul.f32 %v557, 1.442695
        %v594 = vpow.pop %v593
        %v595 = vmul.f32 %v558, 1.442695
        %v596 = vpow.pop %v595
        %v597 = vmul.f32 %v559, 1.442695
        %v598 = vpow.pop %v597
        %v599 = vmul.f32 %v560, 1.442695
        %v600 = vpow.pop %v599
        %v601 = vmul.f32 %v561, 1.442695
        %v602 = vpow.pop %v601
        %v603 = vmul.f32 %v562, 1.442695
        %v604 = vpow.pop %v603
        %v605 = vmul.f32 %v563, 1.442695
        %v606 = vpow.pop %v605
        %v607 = vmul.f32 %v564, 1.442695
        %v608 = vpow.pop %v607
        %v609 = vmul.f32 %v565, 1.442695
        %v610 = vpow.pop %v609
        %v611 = vmul.f32 %v566, 1.442695
        %v612 = vpow.pop %v611
        %v613 = vmul.f32 %v567, 1.442695
        %v614 = vpow.pop %v613
        %v615 = vmul.f32 %v568, 1.442695
        %v616 = vpow.pop %v615
        %v617 = vmul.f32 %v569, 1.442695
        %v618 = vpow.pop %v617
        %v619 = vmul.f32 %v570, 1.442695
        %v620 = vpow.pop %v619
        %v621 = vmul.f32 %v571, 1.442695
        %v622 = vpow.pop %v621
        %v623 = vmul.f32 %v572, 1.442695
        %v624 = vpow.pop %v623
        %v625 = vmul.f32 %v573, 1.442695
        %v626 = vpow.pop %v625
        %v627 = vmul.f32 %v574, 1.442695
        %v628 = vpow.pop %v627
        %v629 = vmul.f32 %v575, 1.442695
        %v630 = vpow.pop %v629
        %v631 = vmul.f32 %v576, 1.442695
        %v632 = vpow.pop %v631
        %v633 = vmul.f32 %v577, 1.442695
        %v634 = vpow.pop %v633
        %v635 = vmul.f32 %v578, 1.442695
        %v636 = vpow.pop %v635
        %v637 = vmul.f32 %v579, 1.442695
        %v638 = vpow.pop %v637
        %v639 = vmul.f32 %v580, 1.442695
        %v640 = vpow.pop %v639
        %v641 = vmul.f32 %v581, 1.442695
        %v642 = vpow.pop %v641
        %v643 = vmul.f32 %v582, 1.442695
        %v644 = vpow.pop %v643
        %v645 = vmul.f32 %v583, 1.442695
        %v646 = vpow.pop %v645
        %v647 = vmul.f32 %v584, 1.442695
        %v648 = vpow.pop %v647
        %v649 = vadd.f32 %v586, %v588
        %650 = vadd.xlane.f32.xlu0 %v649
        %v651 = vpop.xlane.xlu0 %650
        %v652 = vadd.f32 %v590, %v592
        %653 = vadd.xlane.f32.xlu0 %v652
        %v654 = vpop.xlane.xlu0 %653
        %v655 = vadd.f32 %v594, %v596
        %656 = vadd.xlane.f32.xlu0 %v655
        %v657 = vpop.xlane.xlu0 %656
        %v658 = vadd.f32 %v598, %v600
        %659 = vadd.xlane.f32.xlu0 %v658
        %v660 = vpop.xlane.xlu0 %659
        %v661 = vadd.f32 %v602, %v604
        %662 = vadd.xlane.f32.xlu0 %v661
        %v663 = vpop.xlane.xlu0 %662
        %v664 = vadd.f32 %v606, %v608
        %665 = vadd.xlane.f32.xlu0 %v664
        %v666 = vpop.xlane.xlu0 %665
        %v667 = vadd.f32 %v610, %v612
        %668 = vadd.xlane.f32.xlu0 %v667
        %v669 = vpop.xlane.xlu0 %668
        %v670 = vadd.f32 %v614, %v616
        %671 = vadd.xlane.f32.xlu0 %v670
        %v672 = vpop.xlane.xlu0 %671
        %v673 = vadd.f32 %v618, %v620
        %674 = vadd.xlane.f32.xlu0 %v673
        %v675 = vpop.xlane.xlu0 %674
        %v676 = vadd.f32 %v622, %v624
        %677 = vadd.xlane.f32.xlu0 %v676
        %v678 = vpop.xlane.xlu0 %677
        %v679 = vadd.f32 %v626, %v628
        %680 = vadd.xlane.f32.xlu0 %v679
        %v681 = vpop.xlane.xlu0 %680
        %v682 = vadd.f32 %v630, %v632
        %683 = vadd.xlane.f32.xlu0 %v682
        %v684 = vpop.xlane.xlu0 %683
        %v685 = vadd.f32 %v634, %v636
        %686 = vadd.xlane.f32.xlu0 %v685
        %v687 = vpop.xlane.xlu0 %686
        %v688 = vadd.f32 %v638, %v640
        %689 = vadd.xlane.f32.xlu0 %v688
        %v690 = vpop.xlane.xlu0 %689
        %v691 = vadd.f32 %v642, %v644
        %692 = vadd.xlane.f32.xlu0 %v691
        %v693 = vpop.xlane.xlu0 %692
        %v694 = vadd.f32 %v646, %v648
        %695 = vadd.xlane.f32.xlu0 %v694
        %v696 = vpop.xlane.xlu0 %695
        %v697 = vrcp.pop %v651
        %v698 = vrcp.pop %v654
        %v699 = vrcp.pop %v657
        %v700 = vrcp.pop %v660
        %v701 = vrcp.pop %v663
        %v702 = vrcp.pop %v666
        %v703 = vrcp.pop %v669
        %v704 = vrcp.pop %v672
        %v705 = vrcp.pop %v675
        %v706 = vrcp.pop %v678
        %v707 = vrcp.pop %v681
        %v708 = vrcp.pop %v684
        %v709 = vrcp.pop %v687
        %v710 = vrcp.pop %v690
        %v711 = vrcp.pop %v693
        %v712 = vrcp.pop %v696
        %v713 = vmul.f32 %v586, %v697
        %v714 = vmul.f32 %v588, %v697
        %v715 = vmul.f32 %v590, %v698
        %v716 = vmul.f32 %v592, %v698
        %v717 = vmul.f32 %v594, %v699
        %v718 = vmul.f32 %v596, %v699
        %v719 = vmul.f32 %v598, %v700
        %v720 = vmul.f32 %v600, %v700
        %v721 = vmul.f32 %v602, %v701
        %v722 = vmul.f32 %v604, %v701
        %v723 = vmul.f32 %v606, %v702
        %v724 = vmul.f32 %v608, %v702
        %v725 = vmul.f32 %v610, %v703
        %v726 = vmul.f32 %v612, %v703
        %v727 = vmul.f32 %v614, %v704
        %v728 = vmul.f32 %v616, %v704
        %v729 = vmul.f32 %v618, %v705
        %v730 = vmul.f32 %v620, %v705
        %v731 = vmul.f32 %v622, %v706
        %v732 = vmul.f32 %v624, %v706
        %v733 = vmul.f32 %v626, %v707
        %v734 = vmul.f32 %v628, %v707
        %v735 = vmul.f32 %v630, %v708
        %v736 = vmul.f32 %v632, %v708
        %v737 = vmul.f32 %v634, %v709
        %v738 = vmul.f32 %v636, %v709
        %v739 = vmul.f32 %v638, %v710
        %v740 = vmul.f32 %v640, %v710
        %v741 = vmul.f32 %v642, %v711
        %v742 = vmul.f32 %v644, %v711
        %v743 = vmul.f32 %v646, %v712
        %v744 = vmul.f32 %v648, %v712
        %745 = vst [vmem:[%s186] sm:$0xff] %v713
        %746 = vst [vmem:[%s186 + $0x8] sm:$0xff] %v714
        %747 = vst [vmem:[%s186 + $0x10] sm:$0xff] %v715
        %748 = vst [vmem:[%s186 + $0x18] sm:$0xff] %v716
        %749 = vst [vmem:[%s186 + $0x20] sm:$0xff] %v717
        %750 = vst [vmem:[%s186 + $0x28] sm:$0xff] %v718
        %751 = vst [vmem:[%s186 + $0x30] sm:$0xff] %v719
        %752 = vst [vmem:[%s186 + $0x38] sm:$0xff] %v720
        %753 = vst [vmem:[%s186 + $0x40] sm:$0xff] %v721
        %754 = vst [vmem:[%s186 + $0x48] sm:$0xff] %v722
        %755 = vst [vmem:[%s186 + $0x50] sm:$0xff] %v723
        %756 = vst [vmem:[%s186 + $0x58] sm:$0xff] %v724
        %757 = vst [vmem:[%s186 + $0x60] sm:$0xff] %v725
        %758 = vst [vmem:[%s186 + $0x68] sm:$0xff] %v726
        %759 = vst [vmem:[%s186 + $0x70] sm:$0xff] %v727
        %760 = vst [vmem:[%s186 + $0x78] sm:$0xff] %v728
        %761 = vst [vmem:[%s186 + $0x80] sm:$0xff] %v729
        %762 = vst [vmem:[%s186 + $0x88] sm:$0xff] %v730
        %763 = vst [vmem:[%s186 + $0x90] sm:$0xff] %v731
        %764 = vst [vmem:[%s186 + $0x98] sm:$0xff] %v732
        %765 = vst [vmem:[%s186 + $0xa0] sm:$0xff] %v733
        %766 = vst [vmem:[%s186 + $0xa8] sm:$0xff] %v734
        %767 = vst [vmem:[%s186 + $0xb0] sm:$0xff] %v735
        %768 = vst [vmem:[%s186 + $0xb8] sm:$0xff] %v736
        %769 = vst [vmem:[%s186 + $0xc0] sm:$0xff] %v737
        %770 = vst [vmem:[%s186 + $0xc8] sm:$0xff] %v738
        %771 = vst [vmem:[%s186 + $0xd0] sm:$0xff] %v739
        %772 = vst [vmem:[%s186 + $0xd8] sm:$0xff] %v740
        %773 = vst [vmem:[%s186 + $0xe0] sm:$0xff] %v741
        %774 = vst [vmem:[%s186 + $0xe8] sm:$0xff] %v742
        %775 = vst [vmem:[%s186 + $0xf0] sm:$0xff] %v743
        %776 = vst [vmem:[%s186 + $0xf8] sm:$0xff] %v744
        %778 = vmatprep.subr.mxu0 %v714
        %779 = vmatpush1.xpose.msra.mxu0 %v713
        %780 = vmatprep.subr.mxu0 %v716
        %781 = vmatpush1.xpose.msra.mxu0 %v715
        %782 = vmatprep.subr.mxu0 %v718
        %783 = vmatpush1.xpose.msra.mxu0 %v717
        %784 = vmatprep.subr.mxu0 %v720
        %785 = vmatpush1.xpose.msra.mxu0 %v719
        %786 = vmatprep.subr.mxu0 %v722
        %787 = vmatpush1.xpose.msra.mxu0 %v721
        %788 = vmatprep.subr.mxu0 %v724
        %789 = vmatpush1.xpose.msra.mxu0 %v723
        %790 = vmatprep.subr.mxu0 %v726
        %791 = vmatpush1.xpose.msra.mxu0 %v725
        %792 = vmatprep.subr.mxu0 %v728
        %793 = vmatpush1.xpose.msra.mxu0 %v727
        %794 = vmatprep.subr.mxu0 %v730
        %795 = vmatpush1.xpose.msra.mxu0 %v729
        %796 = vmatprep.subr.mxu0 %v732
        %797 = vmatpush1.xpose.msra.mxu0 %v731
        %798 = vmatprep.subr.mxu0 %v734
        %799 = vmatpush1.xpose.msra.mxu0 %v733
        %800 = vmatprep.subr.mxu0 %v736
        %801 = vmatpush1.xpose.msra.mxu0 %v735
        %802 = vmatprep.subr.mxu0 %v738
        %803 = vmatpush1.xpose.msra.mxu0 %v737
        %804 = vmatprep.subr.mxu0 %v740
        %805 = vmatpush1.xpose.msra.mxu0 %v739
        %806 = vmatprep.subr.mxu0 %v742
        %807 = vmatpush1.xpose.msra.mxu0 %v741
        %808 = vmatprep.subr.mxu0 %v744
        %809 = vmatpush1.xpose.msra.mxu0 %v743
        %810 = vmatprep.subr.mxu0 0.0
        %811 = vmatpush1.xpose.msra.mxu0 0.0
        %812 = vmatprep.subr.mxu0 0.0
        %813 = vmatpush1.xpose.msra.mxu0 0.0
        %814 = vmatprep.subr.mxu0 0.0
        %815 = vmatpush1.xpose.msra.mxu0 0.0
        %816 = vmatprep.subr.mxu0 0.0
        %817 = vmatpush1.xpose.msra.mxu0 0.0
        %818 = vmatprep.subr.mxu0 0.0
        %819 = vmatpush1.xpose.msra.mxu0 0.0
        %820 = vmatprep.subr.mxu0 0.0
        %821 = vmatpush1.xpose.msra.mxu0 0.0
        %822 = vmatprep.subr.mxu0 0.0
        %823 = vmatpush1.xpose.msra.mxu0 0.0
        %824 = vmatprep.subr.mxu0 0.0
        %825 = vmatpush1.xpose.msra.mxu0 0.0
        %826 = vmatprep.subr.mxu0 0.0
        %827 = vmatpush1.xpose.msra.mxu0 0.0
        %828 = vmatprep.subr.mxu0 0.0
        %829 = vmatpush1.xpose.msra.mxu0 0.0
        %830 = vmatprep.subr.mxu0 0.0
        %831 = vmatpush1.xpose.msra.mxu0 0.0
        %832 = vmatprep.subr.mxu0 0.0
        %833 = vmatpush1.xpose.msra.mxu0 0.0
        %834 = vmatprep.subr.mxu0 0.0
        %835 = vmatpush1.xpose.msra.mxu0 0.0
        %836 = vmatprep.subr.mxu0 0.0
        %837 = vmatpush1.xpose.msra.mxu0 0.0
        %838 = vmatprep.subr.mxu0 0.0
        %839 = vmatpush1.xpose.msra.mxu0 0.0
        %840 = vmatprep.subr.mxu0 0.0
        %841 = vmatpush1.xpose.msra.mxu0 0.0
        %842 = vmatprep.mubr.f32.mxu0 %v289
        %843 = vmatmul.mubr.f32.gmra.mrb[0].mxu0 %v250
        %v844 = vpop.f32.mrb[0].mxu0
        %v845 = vadd.f32 0.0, %v844
        %v846 = vpop.f32.mrb[0].mxu0
        %847 = vdwg.mxu0
        %v848 = vld [vmem:[%s254] sm:$0xf]
        %s849 = sld [smem:[#allocation4]]
        %v850 = vstv %s849
        %v851 = vmul.f32 %v850, %v845
        %v852 = vadd.f32 %v851, %v848
        %853 = vst [vmem:[%s179] sm:$0xf] %v852
        %s854 = sand.u32 %s82, 1
        %s855 = scalar_lea.sflag [#allocation7], %s854
        %s856 = sand.u32 %s82, 1
        %s857 = smul.addr %s856, 4
        %s858 = scalar_lea.vmem [#allocation8], %s857
        %s859 = sand.u32 %s114, 1
        %s860 = scalar_lea.sflag [#allocation10], %s859
        %s861 = sand.u32 %s114, 1
        %s862 = smul.addr %s861, 256
        %s863 = scalar_lea.vmem [#allocation9], %s862
        // Predicated region
        $region33: #{tpu_custom_call.1} parent=23 // pred_check
          %p864 = pneg %p92
        $region34: #{tpu_custom_call.1} parent=23 // pred_check_branch
          %866 = sbr.rel (%p864) target = $region36
        $region35: #{tpu_custom_call.1} parent=23 // pred_region
          %s867 = smul.u32 %s29, 2
          %s868 = sadd.s32 %s867, %s30
          %s870 = ssub.s32 64, 64
          %871 = vsyncadd %s855, %s870
          %s872 = smul.addr %s28, 2
          %s873 = sadd.s32 %s868, %s872
          %s874 = smul.addr %s873, 64
          %s875 = scalar_lea.hbm %s2, %s874
          %s877 = sshll.u32 %s858, 4
          %s878 = int_to_ptr.vmem [resolvable:$true] %s877
          %880 = dma.vmem_to_hbm [thread:$0]  %s878, 64, %s875, %s855
        $region36: #{tpu_custom_call.1} parent=23 // pred_fallthru
          _
        // Predicated region
        $region37: #{tpu_custom_call.1} parent=23 // pred_check
          %p881 = pneg %p124
        $region38: #{tpu_custom_call.1} parent=23 // pred_check_branch
          %883 = sbr.rel (%p881) target = $region40
        $region39: #{tpu_custom_call.1} parent=23 // pred_region
          %s884 = smul.u32 %s29, 2
          %s885 = sadd.s32 %s884, %s30
          %s886 = smul.u32 16, %s885
          %s888 = ssub.s32 4096, 4096
          %889 = vsyncadd %s860, %s888
          %s890 = smul.addr %s886, 2
          %s891 = smul.addr %s28, 64
          %s892 = sadd.s32 %s890, %s891
          %s893 = smul.addr %s892, 128
          %s894 = scalar_lea.hbm %s3, %s893
          %s895 = sshll.u32 %s863, 4
          %s896 = int_to_ptr.vmem [resolvable:$true] %s895
          %901 = dma.vmem_to_hbm [thread:$0]  %s896, 4096, %s894, %s860, 256, 256, 16
        $region40: #{tpu_custom_call.1} parent=23 // pred_fallthru
          _
      $region24: #{tpu_custom_call.1} parent=5 // pred_fallthru
        _
      %p902 = scmp.le.s32.totalorder 2, %s18
      // Predicated region
      $region41: #{tpu_custom_call.1} parent=5 // pred_check
        %p903 = pneg %p902
      $region42: #{tpu_custom_call.1} parent=5 // pred_check_branch
        %905 = sbr.rel (%p903) target = $region44
      $region43: #{tpu_custom_call.1} parent=5 // pred_region
        %s906 = ssub.s32 %s18, 2
        // Predicated region
        $region45: #{tpu_custom_call.1} parent=43 // pred_check
          %p907 = pneg %p98
        $region46: #{tpu_custom_call.1} parent=43 // pred_check_branch
          %909 = sbr.rel (%p907) target = $region48
        $region47: #{tpu_custom_call.1} parent=43 // pred_region
          %s910 = sand.u32 %s83, 1
          %s911 = scalar_lea.sflag [#allocation7], %s910
          %s912 = sand.u32 %s83, 1
          %s913 = smul.addr %s912, 4
          %s914 = scalar_lea.vmem [#allocation8], %s913
          %915 = dma.done %s911, 64
        $region48: #{tpu_custom_call.1} parent=43 // pred_fallthru
          _
        // Predicated region
        $region49: #{tpu_custom_call.1} parent=43 // pred_check
          %p916 = pneg %p130
        $region50: #{tpu_custom_call.1} parent=43 // pred_check_branch
          %918 = sbr.rel (%p916) target = $region52
        $region51: #{tpu_custom_call.1} parent=43 // pred_region
          %s919 = sand.u32 %s115, 1
          %s920 = scalar_lea.sflag [#allocation10], %s919
          %s921 = sand.u32 %s115, 1
          %s922 = smul.addr %s921, 256
          %s923 = scalar_lea.vmem [#allocation9], %s922
          %924 = dma.done %s920, 4096
        $region52: #{tpu_custom_call.1} parent=43 // pred_fallthru
          _
      $region44: #{tpu_custom_call.1} parent=5 // pred_fallthru
        _
    $region6: #{tpu_custom_call.1} parent=1 // loop_footer
      %s22 = sadd.s32 1, %s18
    $region7: #{tpu_custom_call.1} parent=1 // loop_footer_branch
      %17 = sbr.rel target = $region3
    $region8: #{tpu_custom_call.1} parent=1 // loop_exit
      _
    %925 = vsyncpa [#allocation6], 1
    %s926 = scalar_lea.sflag [#allocation6], 1
    %927 = vsyncpa %s926, 1
    %928 = vsyncpa [#allocation7], 1
    %s929 = scalar_lea.sflag [#allocation7], 1
    %930 = vsyncpa %s929, 1
    %931 = vsyncpa [#allocation10], 1
    %s932 = scalar_lea.sflag [#allocation10], 1
    %933 = vsyncpa %s932, 1

</llo_original>
